<compile_context>
chip_gen: v7x
topology: tpu7x:2x2x1
jax: 0.10.0
libtpu: 0.0.40
codegen_flags: <defaults>
</compile_context>

<pallas_src>
import functools

import jax
import jax.numpy as jnp
from jax.experimental import pallas as pl
from jax.experimental.pallas import tpu as pltpu

H1 = 128
H2 = 64
LN_EPS = 1e-5  # PyTorch nn.LayerNorm default
LANE = 128


def _round_up(x, m):
    return ((x + m - 1) // m) * m


def _layernorm(h, gamma, beta):
    # PyTorch LayerNorm: biased variance over the last dim.
    # Written as (h - mu) * s + beta with s = gamma * rsqrt(var + eps) so the
    # rsqrt lands on the EUP slot and the epilogue is a single FMA-shaped pass.
    mu = jnp.mean(h, axis=-1, keepdims=True)
    c = h - mu
    var = jnp.mean(c * c, axis=-1, keepdims=True)
    s = jax.lax.rsqrt(var + LN_EPS) * gamma
    return c * s + beta


def mlp_small_kernel(
    x_ref,
    w1_ref, b1_ref, g1_ref, be1_ref,
    w2_ref, b2_ref, g2_ref, be2_ref,
    w3_ref, b3_ref,
    o_ref,
):
    # Feed the MXU operands in their native dtype; accumulate in f32.
    x = x_ref[...]

    # Linear(input_dim, 128) + LayerNorm(128) + ReLU
    h1 = jnp.dot(x, w1_ref[...], preferred_element_type=jnp.float32) + b1_ref[...]
    h1 = _layernorm(h1, g1_ref[...], be1_ref[...])
    h1 = jnp.maximum(h1, 0.0)

    # Linear(128, 64) + LayerNorm(64) + ReLU
    h2 = jnp.dot(h1.astype(w2_ref.dtype), w2_ref[...],
                 preferred_element_type=jnp.float32) + b2_ref[...]
    h2 = _layernorm(h2, g2_ref[...], be2_ref[...])
    h2 = jnp.maximum(h2, 0.0)

    # Linear(64, output_dim_padded)  (zero-padded columns -> lane-dense store)
    out = jnp.dot(h2.astype(w3_ref.dtype), w3_ref[...],
                  preferred_element_type=jnp.float32) + b3_ref[...]
    o_ref[...] = out.astype(o_ref.dtype)


@functools.partial(jax.jit, static_argnames=("batch_tile",))
def mlp_small_forward(x, params, batch_tile=256):
    B, input_dim = x.shape
    output_dim = params["w3"].shape[1]
    dtype = x.dtype
    itemsize = jnp.dtype(dtype).itemsize

    # ---- lane-dense output: pad w3 / b3 with zero columns up to a multiple of 128
    out_pad = _round_up(max(output_dim, LANE), LANE)
    w3, b3 = params["w3"], params["b3"]
    if out_pad != output_dim:
        w3 = jnp.pad(w3, ((0, 0), (0, out_pad - output_dim)))
        b3 = jnp.pad(b3, ((0, 0), (0, out_pad - output_dim)))

    # ---- batch tiling (the tuning knob). Sublane-align (16 for bf16, 8 for f32),
    # shrink the tile for tiny batches, and zero-pad the batch to a whole grid.
    sub = 16 if dtype == jnp.bfloat16 else 8
    bt = min(int(batch_tile), _round_up(B, sub))
    bt = max(_round_up(bt, sub), sub)
    b_pad = _round_up(B, bt)
    x_p = jnp.pad(x, ((0, b_pad - B), (0, 0))) if b_pad != B else x
    grid = (b_pad // bt,)

    def full_spec(shape):
        return pl.BlockSpec(shape, lambda i: (0, 0))

    # ---- VMEM budget: double-buffered x/out tiles + (double-buffered) resident
    # params + f32 intermediates, with headroom; capped at v7x's 64 MiB physical.
    param_bytes = sum(
        int(v.size) * jnp.dtype(v.dtype).itemsize
        for v in (params["w1"], params["b1"], params["g1"], params["be1"],
                  params["w2"], params["b2"], params["g2"], params["be2"], w3, b3)
    )
    tile_bytes = 2 * bt * input_dim * itemsize + 2 * bt * out_pad * itemsize
    scratch_bytes = 4 * bt * (H1 + H2 + out_pad)
    vmem_limit = int(1.5 * (tile_bytes + 2 * param_bytes + scratch_bytes)) + (4 << 20)
    vmem_limit = max(16 << 20, min(vmem_limit, 64 << 20))

    # ---- advisory cost estimate for XLA's scheduler around this short call
    flops = 2 * b_pad * (input_dim * H1 + H1 * H2 + H2 * out_pad)
    bytes_accessed = b_pad * (input_dim + out_pad) * itemsize + param_bytes
    cost = pl.CostEstimate(flops=flops, transcendentals=2 * b_pad,
                           bytes_accessed=bytes_accessed)

    out = pl.pallas_call(
        mlp_small_kernel,
        out_shape=jax.ShapeDtypeStruct((b_pad, out_pad), dtype),
        grid_spec=pltpu.PrefetchScalarGridSpec(
            num_scalar_prefetch=0,
            grid=grid,
            in_specs=[
                pl.BlockSpec((bt, input_dim), lambda i: (i, 0)),  # x tile
                full_spec((input_dim, H1)),   # w1
                full_spec((1, H1)),           # b1
                full_spec((1, H1)),           # ln1 gamma
                full_spec((1, H1)),           # ln1 beta
                full_spec((H1, H2)),          # w2
                full_spec((1, H2)),           # b2
                full_spec((1, H2)),           # ln2 gamma
                full_spec((1, H2)),           # ln2 beta
                full_spec((H2, out_pad)),     # w3 (lane-padded)
                full_spec((1, out_pad)),      # b3 (lane-padded)
            ],
            out_specs=pl.BlockSpec((bt, out_pad), lambda i: (i, 0)),
        ),
        compiler_params=pltpu.CompilerParams(
            dimension_semantics=("parallel",),
            vmem_limit_bytes=vmem_limit,
        ),
        cost_estimate=cost,
    )(
        x_p,
        params["w1"], params["b1"], params["g1"], params["be1"],
        params["w2"], params["b2"], params["g2"], params["be2"],
        w3, b3,
    )
    return out[:B, :output_dim]


def init_params(key, input_dim, output_dim, dtype=jnp.float32):
    """Deterministic synthetic init mimicking torch.nn.Linear's U(-1/sqrt(fan_in), +)."""
    ks = jax.random.split(key, 6)

    def lin(kw, kb, fan_in, fan_out):
        bound = 1.0 / jnp.sqrt(fan_in)
        w = jax.random.uniform(kw, (fan_in, fan_out), dtype, -bound, bound)
        b = jax.random.uniform(kb, (1, fan_out), dtype, -bound, bound)
        return w, b

    w1, b1 = lin(ks[0], ks[1], input_dim, H1)
    w2, b2 = lin(ks[2], ks[3], H1, H2)
    w3, b3 = lin(ks[4], ks[5], H2, output_dim)
    return {
        "w1": w1, "b1": b1,
        "g1": jnp.ones((1, H1), dtype), "be1": jnp.zeros((1, H1), dtype),
        "w2": w2, "b2": b2,
        "g2": jnp.ones((1, H2), dtype), "be2": jnp.zeros((1, H2), dtype),
        "w3": w3, "b3": b3,
    }


def reference_forward(x, p):
    h = x @ p["w1"] + p["b1"]
    mu = h.mean(-1, keepdims=True)
    var = ((h - mu) ** 2).mean(-1, keepdims=True)
    h = (h - mu) / jnp.sqrt(var + LN_EPS) * p["g1"] + p["be1"]
    h = jnp.maximum(h, 0.0)
    h = h @ p["w2"] + p["b2"]
    mu = h.mean(-1, keepdims=True)
    var = ((h - mu) ** 2).mean(-1, keepdims=True)
    h = (h - mu) / jnp.sqrt(var + LN_EPS) * p["g2"] + p["be2"]
    h = jnp.maximum(h, 0.0)
    return h @ p["w3"] + p["b3"]


if __name__ == "__main__":
    key = jax.random.PRNGKey(0)
    k_x, k_p = jax.random.split(key)

    batch, input_dim, output_dim = 16, 32, 10
    x = jax.random.normal(k_x, (batch, input_dim), jnp.float32)
    params = init_params(k_p, input_dim, output_dim)

    out = mlp_small_forward(x, params)          # small batch -> single fat tile
    out = jax.block_until_ready(out)

    ref = reference_forward(x, params)
    assert out.shape == (batch, output_dim)
    assert jnp.allclose(out, ref, atol=1e-4, rtol=1e-4), "mismatch vs JAX reference"

    print("KERNEL_OK")
</pallas_src>

<mosaic_0001>
module attributes {stable_mosaic.version = 11 : i64} {
  func.func @mlp_small_kernel(%arg0: i32, %arg1: memref<16x32xf32, #tpu.memory_space<vmem>>, %arg2: memref<32x128xf32, #tpu.memory_space<vmem>>, %arg3: memref<1x128xf32, #tpu.memory_space<vmem>>, %arg4: memref<1x128xf32, #tpu.memory_space<vmem>>, %arg5: memref<1x128xf32, #tpu.memory_space<vmem>>, %arg6: memref<128x64xf32, #tpu.memory_space<vmem>>, %arg7: memref<1x64xf32, #tpu.memory_space<vmem>>, %arg8: memref<1x64xf32, #tpu.memory_space<vmem>>, %arg9: memref<1x64xf32, #tpu.memory_space<vmem>>, %arg10: memref<64x128xf32, #tpu.memory_space<vmem>>, %arg11: memref<1x128xf32, #tpu.memory_space<vmem>>, %arg12: memref<16x128xf32, #tpu.memory_space<vmem>>) attributes {dimension_semantics = [#tpu.dimension_semantics<parallel>], iteration_bounds = array<i64: 1>, scalar_prefetch = 0 : i64, scratch_operands = 0 : i64, tpu.core_type = #tpu.core_type<tc>, window_params = [{transform_indices = @transform_0, window_bounds = array<i64: 16, 32>}, {pipeline_mode = #tpu.pipeline_mode<synchronous>, transform_indices = @transform_1, window_bounds = array<i64: 32, 128>}, {pipeline_mode = #tpu.pipeline_mode<synchronous>, transform_indices = @transform_2, window_bounds = array<i64: 1, 128>}, {pipeline_mode = #tpu.pipeline_mode<synchronous>, transform_indices = @transform_3, window_bounds = array<i64: 1, 128>}, {pipeline_mode = #tpu.pipeline_mode<synchronous>, transform_indices = @transform_4, window_bounds = array<i64: 1, 128>}, {pipeline_mode = #tpu.pipeline_mode<synchronous>, transform_indices = @transform_5, window_bounds = array<i64: 128, 64>}, {pipeline_mode = #tpu.pipeline_mode<synchronous>, transform_indices = @transform_6, window_bounds = array<i64: 1, 64>}, {pipeline_mode = #tpu.pipeline_mode<synchronous>, transform_indices = @transform_7, window_bounds = array<i64: 1, 64>}, {pipeline_mode = #tpu.pipeline_mode<synchronous>, transform_indices = @transform_8, window_bounds = array<i64: 1, 64>}, {pipeline_mode = #tpu.pipeline_mode<synchronous>, transform_indices = @transform_9, window_bounds = array<i64: 64, 128>}, {pipeline_mode = #tpu.pipeline_mode<synchronous>, transform_indices = @transform_10, window_bounds = array<i64: 1, 128>}, {transform_indices = @transform_11, window_bounds = array<i64: 16, 128>}]} {
    %c0 = arith.constant 0 : index
    %c0_0 = arith.constant 0 : index
    %0 = vector.load %arg1[%c0, %c0_0] : memref<16x32xf32, #tpu.memory_space<vmem>>, vector<16x32xf32>
    %c0_1 = arith.constant 0 : index
    %c0_2 = arith.constant 0 : index
    %1 = vector.load %arg2[%c0_1, %c0_2] : memref<32x128xf32, #tpu.memory_space<vmem>>, vector<32x128xf32>
    %cst = arith.constant dense<0.000000e+00> : vector<16x128xf32>
    %2 = tpu.matmul %0, %1, %cst {dimension_numbers = #tpu.dot_dimension_numbers<[1], [0], [0], [1], [0, 0, 1, 1], [], []>} : vector<16x32xf32>, vector<32x128xf32>, vector<16x128xf32> -> vector<16x128xf32>
    %c0_3 = arith.constant 0 : index
    %c0_4 = arith.constant 0 : index
    %3 = vector.load %arg3[%c0_3, %c0_4] : memref<1x128xf32, #tpu.memory_space<vmem>>, vector<1x128xf32>
    %4 = vector.broadcast %3 : vector<1x128xf32> to vector<16x128xf32>
    %5 = arith.addf %2, %4 : vector<16x128xf32>
    %c0_5 = arith.constant 0 : index
    %c0_6 = arith.constant 0 : index
    %6 = vector.load %arg4[%c0_5, %c0_6] : memref<1x128xf32, #tpu.memory_space<vmem>>, vector<1x128xf32>
    %c0_7 = arith.constant 0 : index
    %c0_8 = arith.constant 0 : index
    %7 = vector.load %arg5[%c0_7, %c0_8] : memref<1x128xf32, #tpu.memory_space<vmem>>, vector<1x128xf32>
    %cst_9 = arith.constant dense<0.000000e+00> : vector<16xf32>
    %8 = vector.multi_reduction <add>, %5, %cst_9 [1] : vector<16x128xf32> to vector<16xf32>
    %9 = vector.shape_cast %8 : vector<16xf32> to vector<16x1xf32>
    %cst_10 = arith.constant 1.280000e+02 : f32
    %10 = vector.broadcast %cst_10 : f32 to vector<16x1xf32>
    %11 = arith.divf %9, %10 : vector<16x1xf32>
    %12 = vector.broadcast %11 : vector<16x1xf32> to vector<16x128xf32>
    %13 = arith.subf %5, %12 : vector<16x128xf32>
    %14 = arith.mulf %13, %13 : vector<16x128xf32>
    %cst_11 = arith.constant dense<0.000000e+00> : vector<16xf32>
    %15 = vector.multi_reduction <add>, %14, %cst_11 [1] : vector<16x128xf32> to vector<16xf32>
    %16 = vector.shape_cast %15 : vector<16xf32> to vector<16x1xf32>
    %cst_12 = arith.constant 1.280000e+02 : f32
    %17 = vector.broadcast %cst_12 : f32 to vector<16x1xf32>
    %18 = arith.divf %16, %17 : vector<16x1xf32>
    %cst_13 = arith.constant 9.99999974E-6 : f32
    %19 = vector.broadcast %cst_13 : f32 to vector<16x1xf32>
    %20 = arith.addf %18, %19 : vector<16x1xf32>
    %21 = math.rsqrt %20 : vector<16x1xf32>
    %22 = vector.broadcast %21 : vector<16x1xf32> to vector<16x128xf32>
    %23 = vector.broadcast %6 : vector<1x128xf32> to vector<16x128xf32>
    %24 = arith.mulf %22, %23 : vector<16x128xf32>
    %25 = arith.mulf %13, %24 : vector<16x128xf32>
    %26 = vector.broadcast %7 : vector<1x128xf32> to vector<16x128xf32>
    %27 = arith.addf %25, %26 : vector<16x128xf32>
    %cst_14 = arith.constant 0.000000e+00 : f32
    %28 = vector.broadcast %cst_14 : f32 to vector<16x128xf32>
    %29 = arith.maximumf %27, %28 : vector<16x128xf32>
    %c0_15 = arith.constant 0 : index
    %c0_16 = arith.constant 0 : index
    %30 = vector.load %arg6[%c0_15, %c0_16] : memref<128x64xf32, #tpu.memory_space<vmem>>, vector<128x64xf32>
    %cst_17 = arith.constant dense<0.000000e+00> : vector<16x64xf32>
    %31 = tpu.matmul %29, %30, %cst_17 {dimension_numbers = #tpu.dot_dimension_numbers<[1], [0], [0], [1], [0, 0, 1, 1], [], []>} : vector<16x128xf32>, vector<128x64xf32>, vector<16x64xf32> -> vector<16x64xf32>
    %c0_18 = arith.constant 0 : index
    %c0_19 = arith.constant 0 : index
    %32 = vector.load %arg7[%c0_18, %c0_19] : memref<1x64xf32, #tpu.memory_space<vmem>>, vector<1x64xf32>
    %33 = vector.broadcast %32 : vector<1x64xf32> to vector<16x64xf32>
    %34 = arith.addf %31, %33 : vector<16x64xf32>
    %c0_20 = arith.constant 0 : index
    %c0_21 = arith.constant 0 : index
    %35 = vector.load %arg8[%c0_20, %c0_21] : memref<1x64xf32, #tpu.memory_space<vmem>>, vector<1x64xf32>
    %c0_22 = arith.constant 0 : index
    %c0_23 = arith.constant 0 : index
    %36 = vector.load %arg9[%c0_22, %c0_23] : memref<1x64xf32, #tpu.memory_space<vmem>>, vector<1x64xf32>
    %cst_24 = arith.constant dense<0.000000e+00> : vector<16xf32>
    %37 = vector.multi_reduction <add>, %34, %cst_24 [1] : vector<16x64xf32> to vector<16xf32>
    %38 = vector.shape_cast %37 : vector<16xf32> to vector<16x1xf32>
    %cst_25 = arith.constant 6.400000e+01 : f32
    %39 = vector.broadcast %cst_25 : f32 to vector<16x1xf32>
    %40 = arith.divf %38, %39 : vector<16x1xf32>
    %41 = vector.broadcast %40 : vector<16x1xf32> to vector<16x64xf32>
    %42 = arith.subf %34, %41 : vector<16x64xf32>
    %43 = arith.mulf %42, %42 : vector<16x64xf32>
    %cst_26 = arith.constant dense<0.000000e+00> : vector<16xf32>
    %44 = vector.multi_reduction <add>, %43, %cst_26 [1] : vector<16x64xf32> to vector<16xf32>
    %45 = vector.shape_cast %44 : vector<16xf32> to vector<16x1xf32>
    %cst_27 = arith.constant 6.400000e+01 : f32
    %46 = vector.broadcast %cst_27 : f32 to vector<16x1xf32>
    %47 = arith.divf %45, %46 : vector<16x1xf32>
    %cst_28 = arith.constant 9.99999974E-6 : f32
    %48 = vector.broadcast %cst_28 : f32 to vector<16x1xf32>
    %49 = arith.addf %47, %48 : vector<16x1xf32>
    %50 = math.rsqrt %49 : vector<16x1xf32>
    %51 = vector.broadcast %50 : vector<16x1xf32> to vector<16x64xf32>
    %52 = vector.broadcast %35 : vector<1x64xf32> to vector<16x64xf32>
    %53 = arith.mulf %51, %52 : vector<16x64xf32>
    %54 = arith.mulf %42, %53 : vector<16x64xf32>
    %55 = vector.broadcast %36 : vector<1x64xf32> to vector<16x64xf32>
    %56 = arith.addf %54, %55 : vector<16x64xf32>
    %cst_29 = arith.constant 0.000000e+00 : f32
    %57 = vector.broadcast %cst_29 : f32 to vector<16x64xf32>
    %58 = arith.maximumf %56, %57 : vector<16x64xf32>
    %c0_30 = arith.constant 0 : index
    %c0_31 = arith.constant 0 : index
    %59 = vector.load %arg10[%c0_30, %c0_31] : memref<64x128xf32, #tpu.memory_space<vmem>>, vector<64x128xf32>
    %cst_32 = arith.constant dense<0.000000e+00> : vector<16x128xf32>
    %60 = tpu.matmul %58, %59, %cst_32 {dimension_numbers = #tpu.dot_dimension_numbers<[1], [0], [0], [1], [0, 0, 1, 1], [], []>} : vector<16x64xf32>, vector<64x128xf32>, vector<16x128xf32> -> vector<16x128xf32>
    %c0_33 = arith.constant 0 : index
    %c0_34 = arith.constant 0 : index
    %61 = vector.load %arg11[%c0_33, %c0_34] : memref<1x128xf32, #tpu.memory_space<vmem>>, vector<1x128xf32>
    %62 = vector.broadcast %61 : vector<1x128xf32> to vector<16x128xf32>
    %63 = arith.addf %60, %62 : vector<16x128xf32>
    %c0_35 = arith.constant 0 : index
    %c0_36 = arith.constant 0 : index
    %64 = vector.load %arg12[%c0_35, %c0_36] : memref<16x128xf32, #tpu.memory_space<vmem>>, vector<16x128xf32>
    tpu.vector_store %arg12[%c0_35, %c0_36], %63 {strides = array<i32>} : memref<16x128xf32, #tpu.memory_space<vmem>>, vector<16x128xf32>,
    return
  }
  func.func @transform_0(%arg0: i32) -> (i32, i32) {
    %c0_i32 = arith.constant 0 : i32
    %c0_i32_0 = arith.constant 0 : i32
    return %arg0, %c0_i32 : i32, i32
  }
  func.func @transform_1(%arg0: i32) -> (i32, i32) {
    %c0_i32 = arith.constant 0 : i32
    %c0_i32_0 = arith.constant 0 : i32
    %c0_i32_1 = arith.constant 0 : i32
    return %c0_i32, %c0_i32_0 : i32, i32
  }
  func.func @transform_2(%arg0: i32) -> (i32, i32) {
    %c0_i32 = arith.constant 0 : i32
    %c0_i32_0 = arith.constant 0 : i32
    %c0_i32_1 = arith.constant 0 : i32
    return %c0_i32, %c0_i32_0 : i32, i32
  }
  func.func @transform_3(%arg0: i32) -> (i32, i32) {
    %c0_i32 = arith.constant 0 : i32
    %c0_i32_0 = arith.constant 0 : i32
    %c0_i32_1 = arith.constant 0 : i32
    return %c0_i32, %c0_i32_0 : i32, i32
  }
  func.func @transform_4(%arg0: i32) -> (i32, i32) {
    %c0_i32 = arith.constant 0 : i32
    %c0_i32_0 = arith.constant 0 : i32
    %c0_i32_1 = arith.constant 0 : i32
    return %c0_i32, %c0_i32_0 : i32, i32
  }
  func.func @transform_5(%arg0: i32) -> (i32, i32) {
    %c0_i32 = arith.constant 0 : i32
    %c0_i32_0 = arith.constant 0 : i32
    %c0_i32_1 = arith.constant 0 : i32
    return %c0_i32, %c0_i32_0 : i32, i32
  }
  func.func @transform_6(%arg0: i32) -> (i32, i32) {
    %c0_i32 = arith.constant 0 : i32
    %c0_i32_0 = arith.constant 0 : i32
    %c0_i32_1 = arith.constant 0 : i32
    return %c0_i32, %c0_i32_0 : i32, i32
  }
  func.func @transform_7(%arg0: i32) -> (i32, i32) {
    %c0_i32 = arith.constant 0 : i32
    %c0_i32_0 = arith.constant 0 : i32
    %c0_i32_1 = arith.constant 0 : i32
    return %c0_i32, %c0_i32_0 : i32, i32
  }
  func.func @transform_8(%arg0: i32) -> (i32, i32) {
    %c0_i32 = arith.constant 0 : i32
    %c0_i32_0 = arith.constant 0 : i32
    %c0_i32_1 = arith.constant 0 : i32
    return %c0_i32, %c0_i32_0 : i32, i32
  }
  func.func @transform_9(%arg0: i32) -> (i32, i32) {
    %c0_i32 = arith.constant 0 : i32
    %c0_i32_0 = arith.constant 0 : i32
    %c0_i32_1 = arith.constant 0 : i32
    return %c0_i32, %c0_i32_0 : i32, i32
  }
  func.func @transform_10(%arg0: i32) -> (i32, i32) {
    %c0_i32 = arith.constant 0 : i32
    %c0_i32_0 = arith.constant 0 : i32
    %c0_i32_1 = arith.constant 0 : i32
    return %c0_i32, %c0_i32_0 : i32, i32
  }
  func.func @transform_11(%arg0: i32) -> (i32, i32) {
    %c0_i32 = arith.constant 0 : i32
    %c0_i32_0 = arith.constant 0 : i32
    return %arg0, %c0_i32 : i32, i32
  }
}

</mosaic_0001>

<llo_original>
// kernel: mlp_small_forward.1
$region0: #{mlp_small_forward.1}
  #allocation0 [shape = 'u32[]', space=smem, size = 0x4, offset = 0x4, fixed_abs, tag = 'smem constant byte address 0x4 - core index']
  #allocation1 [shape = 'u32[144,128]{1,0:T(1,128)}', space=vmem, size = 0x12000, scoped, tag = 'internal scratch']
  %s0 = inlined_call_operand.vmem [shape: f32[16,32], index: 0, kind: input, shape index: {}]
  %s1 = inlined_call_operand.vmem [shape: f32[32,128], index: 1, kind: input, shape index: {}]
  %s2 = inlined_call_operand.vmem [shape: f32[1,128], index: 2, kind: input, shape index: {}]
  %s3 = inlined_call_operand.vmem [shape: f32[1,128], index: 3, kind: input, shape index: {}]
  %s4 = inlined_call_operand.vmem [shape: f32[1,128], index: 4, kind: input, shape index: {}]
  %s5 = inlined_call_operand.vmem [shape: f32[128,64], index: 5, kind: input, shape index: {}]
  %s6 = inlined_call_operand.vmem [shape: f32[1,64], index: 6, kind: input, shape index: {}]
  %s7 = inlined_call_operand.vmem [shape: f32[1,64], index: 7, kind: input, shape index: {}]
  %s8 = inlined_call_operand.vmem [shape: f32[1,64], index: 8, kind: input, shape index: {}]
  %s9 = inlined_call_operand.vmem [shape: f32[64,128], index: 9, kind: input, shape index: {}]
  %s10 = inlined_call_operand.vmem [shape: f32[1,128], index: 10, kind: input, shape index: {}]
  %s11 = inlined_call_operand.hbm [shape: f32[16,128], index: 11, kind: output, shape index: {}]
  %s12 = sld [smem:[#allocation0]]
  $region54: #{mlp_small_forward.1} parent=0
    _
  %s14 = ssub.s32 1, %s12
  %s15 = scalar_select 0, %s14, %s12
  $region1: #{mlp_small_forward.1} parent=0
    #allocation2 [shape = 'u8[8192]{0}', space=vmem, size = 0x2000, scoped, tag = 'output window, operand 0, single buffered']
    #allocation3 [shape = 's32[1]{0}', space=sflag, size = 0x4, scoped, tag = 'scoped memory for mlp_small_forward.1']
    %16 = vsyncpa [#allocation3], 0
    // Predicated region
    $region2: #{mlp_small_forward.1} parent=1 // pred_check
      _
    $region3: #{mlp_small_forward.1} parent=1 // pred_check_branch
      %18 = sbr.rel (0) target = $region5
    $region4: #{mlp_small_forward.1} parent=1 // pred_region
      _
    $region5: #{mlp_small_forward.1} parent=1 // pred_fallthru
      _
    // Predicated region
    $region6: #{mlp_small_forward.1} parent=1 // pred_check
      _
    $region7: #{mlp_small_forward.1} parent=1 // pred_check_branch
      %20 = sbr.rel (0) target = $region9
    $region8: #{mlp_small_forward.1} parent=1 // pred_region
      _
    $region9: #{mlp_small_forward.1} parent=1 // pred_fallthru
      _
    // Predicated region
    $region10: #{mlp_small_forward.1} parent=1 // pred_check
      _
    $region11: #{mlp_small_forward.1} parent=1 // pred_check_branch
      %22 = sbr.rel (0) target = $region13
    $region12: #{mlp_small_forward.1} parent=1 // pred_region
      _
    $region13: #{mlp_small_forward.1} parent=1 // pred_fallthru
      _
    // Predicated region
    $region14: #{mlp_small_forward.1} parent=1 // pred_check
      _
    $region15: #{mlp_small_forward.1} parent=1 // pred_check_branch
      %24 = sbr.rel (0) target = $region17
    $region16: #{mlp_small_forward.1} parent=1 // pred_region
      _
    $region17: #{mlp_small_forward.1} parent=1 // pred_fallthru
      _
    // Predicated region
    $region18: #{mlp_small_forward.1} parent=1 // pred_check
      _
    $region19: #{mlp_small_forward.1} parent=1 // pred_check_branch
      %26 = sbr.rel (0) target = $region21
    $region20: #{mlp_small_forward.1} parent=1 // pred_region
      _
    $region21: #{mlp_small_forward.1} parent=1 // pred_fallthru
      _
    // Predicated region
    $region22: #{mlp_small_forward.1} parent=1 // pred_check
      _
    $region23: #{mlp_small_forward.1} parent=1 // pred_check_branch
      %28 = sbr.rel (0) target = $region25
    $region24: #{mlp_small_forward.1} parent=1 // pred_region
      _
    $region25: #{mlp_small_forward.1} parent=1 // pred_fallthru
      _
    // Predicated region
    $region26: #{mlp_small_forward.1} parent=1 // pred_check
      _
    $region27: #{mlp_small_forward.1} parent=1 // pred_check_branch
      %30 = sbr.rel (0) target = $region29
    $region28: #{mlp_small_forward.1} parent=1 // pred_region
      _
    $region29: #{mlp_small_forward.1} parent=1 // pred_fallthru
      _
    // Predicated region
    $region30: #{mlp_small_forward.1} parent=1 // pred_check
      _
    $region31: #{mlp_small_forward.1} parent=1 // pred_check_branch
      %32 = sbr.rel (0) target = $region33
    $region32: #{mlp_small_forward.1} parent=1 // pred_region
      _
    $region33: #{mlp_small_forward.1} parent=1 // pred_fallthru
      _
    // Predicated region
    $region34: #{mlp_small_forward.1} parent=1 // pred_check
      _
    $region35: #{mlp_small_forward.1} parent=1 // pred_check_branch
      %34 = sbr.rel (0) target = $region37
    $region36: #{mlp_small_forward.1} parent=1 // pred_region
      _
    $region37: #{mlp_small_forward.1} parent=1 // pred_fallthru
      _
    // Predicated region
    $region38: #{mlp_small_forward.1} parent=1 // pred_check
      _
    $region39: #{mlp_small_forward.1} parent=1 // pred_check_branch
      %36 = sbr.rel (0) target = $region41
    $region40: #{mlp_small_forward.1} parent=1 // pred_region
      _
    $region41: #{mlp_small_forward.1} parent=1 // pred_fallthru
      _
    // Predicated region
    $region42: #{mlp_small_forward.1} parent=1 // pred_check
      _
    $region43: #{mlp_small_forward.1} parent=1 // pred_check_branch
      %38 = sbr.rel (0) target = $region45
    $region44: #{mlp_small_forward.1} parent=1 // pred_region
      _
    $region45: #{mlp_small_forward.1} parent=1 // pred_fallthru
      _
    %v39 = vld [vmem:[%s0] sm:$0xff]
    %v40 = vld [vmem:[%s0 + $0x8] sm:$0xff]
    %v41 = vld [vmem:[%s1] sm:$0xff]
    %v42 = vld [vmem:[%s1 + $0x8] sm:$0xff]
    %v43 = vld [vmem:[%s1 + $0x10] sm:$0xff]
    %v44 = vld [vmem:[%s1 + $0x18] sm:$0xff]
    %v45 = vld [vmem:[%s2] sm:$0x1]
    %v47 = vlaneseq
    %v48 = vshrl.u32 %v47, 7
    %v49 = vsub.s32 0, %v48
    %v50 = vrot.slane %v45, %v49
    %vm52 = vcmask 261120
    %v54 = vsel %vm52, %v39, 0
    %v57 = vsel %vm52, %v40, 0
    %59 = vmatprep.subr.mxu0 0.0
    %60 = vmatpush1.msra.mxu0 %v41
    %61 = vmatprep.subr.mxu0 0.0
    %62 = vmatpush1.msra.mxu0 %v42
    %63 = vmatprep.subr.mxu0 0.0
    %64 = vmatpush1.msra.mxu0 %v43
    %65 = vmatprep.subr.mxu0 0.0
    %66 = vmatpush1.msra.mxu0 %v44
    %67 = vmatprep.subr.mxu0 0.0
    %68 = vmatpush1.msra.mxu0 0.0
    %69 = vmatprep.subr.mxu0 0.0
    %70 = vmatpush1.msra.mxu0 0.0
    %71 = vmatprep.subr.mxu0 0.0
    %72 = vmatpush1.msra.mxu0 0.0
    %73 = vmatprep.subr.mxu0 0.0
    %74 = vmatpush1.msra.mxu0 0.0
    %75 = vmatprep.subr.mxu0 0.0
    %76 = vmatpush1.msra.mxu0 0.0
    %77 = vmatprep.subr.mxu0 0.0
    %78 = vmatpush1.msra.mxu0 0.0
    %79 = vmatprep.subr.mxu0 0.0
    %80 = vmatpush1.msra.mxu0 0.0
    %81 = vmatprep.subr.mxu0 0.0
    %82 = vmatpush1.msra.mxu0 0.0
    %83 = vmatprep.subr.mxu0 0.0
    %84 = vmatpush1.msra.mxu0 0.0
    %85 = vmatprep.subr.mxu0 0.0
    %86 = vmatpush1.msra.mxu0 0.0
    %87 = vmatprep.subr.mxu0 0.0
    %88 = vmatpush1.msra.mxu0 0.0
    %89 = vmatprep.subr.mxu0 0.0
    %90 = vmatpush1.msra.mxu0 0.0
    %91 = vmatprep.subr.mxu0 0.0
    %92 = vmatpush1.msra.mxu0 0.0
    %93 = vmatprep.subr.mxu0 0.0
    %94 = vmatpush1.msra.mxu0 0.0
    %95 = vmatprep.subr.mxu0 0.0
    %96 = vmatpush1.msra.mxu0 0.0
    %97 = vmatprep.subr.mxu0 0.0
    %98 = vmatpush1.msra.mxu0 0.0
    %99 = vmatprep.subr.mxu0 0.0
    %100 = vmatpush1.msra.mxu0 0.0
    %101 = vmatprep.subr.mxu0 0.0
    %102 = vmatpush1.msra.mxu0 0.0
    %103 = vmatprep.subr.mxu0 0.0
    %104 = vmatpush1.msra.mxu0 0.0
    %105 = vmatprep.subr.mxu0 0.0
    %106 = vmatpush1.msra.mxu0 0.0
    %107 = vmatprep.subr.mxu0 0.0
    %108 = vmatpush1.msra.mxu0 0.0
    %109 = vmatprep.subr.mxu0 0.0
    %110 = vmatpush1.msra.mxu0 0.0
    %111 = vmatprep.subr.mxu0 0.0
    %112 = vmatpush1.msra.mxu0 0.0
    %113 = vmatprep.subr.mxu0 0.0
    %114 = vmatpush1.msra.mxu0 0.0
    %115 = vmatprep.subr.mxu0 0.0
    %116 = vmatpush1.msra.mxu0 0.0
    %117 = vmatprep.subr.mxu0 0.0
    %118 = vmatpush1.msra.mxu0 0.0
    %119 = vmatprep.subr.mxu0 0.0
    %120 = vmatpush1.msra.mxu0 0.0
    %121 = vmatprep.subr.mxu0 0.0
    %122 = vmatpush1.msra.mxu0 0.0
    %123 = vmatprep.mubr.f32.mxu0 0.0
    %124 = vmatmul.mubr.f32.gmra.mrb[0].mxu0 %v54
    %v125 = vpop.f32.mrb[0].mxu0
    %v126 = vadd.f32 %v50, %v125
    %v127 = vpop.f32.mrb[0].mxu0
    %128 = vmatprep.mubr.f32.mxu0 0.0
    %129 = vmatmul.mubr.f32.gmra.mrb[0].mxu0 %v57
    %v130 = vpop.f32.mrb[0].mxu0
    %v131 = vadd.f32 %v50, %v130
    %v132 = vpop.f32.mrb[0].mxu0
    %133 = vdwg.mxu0
    %v134 = vld [vmem:[%s3] sm:$0x1]
    %v135 = vld [vmem:[%s4] sm:$0x1]
    %136 = vadd.xlane.f32.xlu0 %v126
    %v137 = vpop.xlane.xlu0 %136
    %138 = vadd.xlane.f32.xlu0 %v131
    %v139 = vpop.xlane.xlu0 %138
    %v140 = vrcp.pop 128.0
    %v141 = vmul.f32 %v137, %v140
    %v142 = vmul.f32 %v139, %v140
    %v143 = vsub.f32 %v126, %v141
    %v144 = vsub.f32 %v131, %v142
    %v145 = vmul.f32 %v143, %v143
    %v146 = vmul.f32 %v144, %v144
    %147 = vadd.xlane.f32.xlu0 %v145
    %v148 = vpop.xlane.xlu0 %147
    %149 = vadd.xlane.f32.xlu0 %v146
    %v150 = vpop.xlane.xlu0 %149
    %v151 = vmul.f32 %v148, %v140
    %v152 = vmul.f32 %v150, %v140
    %v153 = vadd.f32 %v151, 1e-05
    %v154 = vadd.f32 %v152, 1e-05
    %v155 = vrsqrt.pop %v153
    %v156 = vrsqrt.pop %v154
    %v158 = vlaneseq
    %v159 = vshrl.u32 %v158, 7
    %v160 = vsub.s32 0, %v159
    %v161 = vrot.slane %v134, %v160
    %v163 = vmul.f32 %v155, %v161
    %v164 = vmul.f32 %v156, %v161
    %v165 = vmul.f32 %v143, %v163
    %v166 = vmul.f32 %v144, %v164
    %v168 = vlaneseq
    %v169 = vshrl.u32 %v168, 7
    %v170 = vsub.s32 0, %v169
    %v171 = vrot.slane %v135, %v170
    %v173 = vadd.f32 %v165, %v171
    %v174 = vadd.f32 %v166, %v171
    %v175 = vmax.f32 %v173, 0.0
    %v176 = vmax.f32 %v174, 0.0
    %v177 = vld [vmem:[%s5] sm:$0xff]
    %v178 = vld [vmem:[%s5 + $0x8] sm:$0xff]
    %v179 = vld [vmem:[%s5 + $0x10] sm:$0xff]
    %v180 = vld [vmem:[%s5 + $0x18] sm:$0xff]
    %v181 = vld [vmem:[%s5 + $0x20] sm:$0xff]
    %v182 = vld [vmem:[%s5 + $0x28] sm:$0xff]
    %v183 = vld [vmem:[%s5 + $0x30] sm:$0xff]
    %v184 = vld [vmem:[%s5 + $0x38] sm:$0xff]
    %v185 = vld [vmem:[%s5 + $0x40] sm:$0xff]
    %v186 = vld [vmem:[%s5 + $0x48] sm:$0xff]
    %v187 = vld [vmem:[%s5 + $0x50] sm:$0xff]
    %v188 = vld [vmem:[%s5 + $0x58] sm:$0xff]
    %v189 = vld [vmem:[%s5 + $0x60] sm:$0xff]
    %v190 = vld [vmem:[%s5 + $0x68] sm:$0xff]
    %v191 = vld [vmem:[%s5 + $0x70] sm:$0xff]
    %v192 = vld [vmem:[%s5 + $0x78] sm:$0xff]
    %v193 = vld [vmem:[%s6] sm:$0x1]
    %v195 = vlaneseq
    %v196 = vshrl.u32 %v195, 7
    %v197 = vsub.s32 0, %v196
    %v198 = vrot.slane %v193, %v197
    %200 = vmatprep.subr.mxu0 0.0
    %201 = vmatpush1.msra.mxu0 %v177
    %202 = vmatprep.subr.mxu0 0.0
    %203 = vmatpush1.msra.mxu0 %v178
    %204 = vmatprep.subr.mxu0 0.0
    %205 = vmatpush1.msra.mxu0 %v179
    %206 = vmatprep.subr.mxu0 0.0
    %207 = vmatpush1.msra.mxu0 %v180
    %208 = vmatprep.subr.mxu0 0.0
    %209 = vmatpush1.msra.mxu0 %v181
    %210 = vmatprep.subr.mxu0 0.0
    %211 = vmatpush1.msra.mxu0 %v182
    %212 = vmatprep.subr.mxu0 0.0
    %213 = vmatpush1.msra.mxu0 %v183
    %214 = vmatprep.subr.mxu0 0.0
    %215 = vmatpush1.msra.mxu0 %v184
    %216 = vmatprep.subr.mxu0 0.0
    %217 = vmatpush1.msra.mxu0 %v185
    %218 = vmatprep.subr.mxu0 0.0
    %219 = vmatpush1.msra.mxu0 %v186
    %220 = vmatprep.subr.mxu0 0.0
    %221 = vmatpush1.msra.mxu0 %v187
    %222 = vmatprep.subr.mxu0 0.0
    %223 = vmatpush1.msra.mxu0 %v188
    %224 = vmatprep.subr.mxu0 0.0
    %225 = vmatpush1.msra.mxu0 %v189
    %226 = vmatprep.subr.mxu0 0.0
    %227 = vmatpush1.msra.mxu0 %v190
    %228 = vmatprep.subr.mxu0 0.0
    %229 = vmatpush1.msra.mxu0 %v191
    %230 = vmatprep.subr.mxu0 0.0
    %231 = vmatpush1.msra.mxu0 %v192
    %232 = vmatprep.subr.mxu0 0.0
    %233 = vmatpush1.msra.mxu0 0.0
    %234 = vmatprep.subr.mxu0 0.0
    %235 = vmatpush1.msra.mxu0 0.0
    %236 = vmatprep.subr.mxu0 0.0
    %237 = vmatpush1.msra.mxu0 0.0
    %238 = vmatprep.subr.mxu0 0.0
    %239 = vmatpush1.msra.mxu0 0.0
    %240 = vmatprep.subr.mxu0 0.0
    %241 = vmatpush1.msra.mxu0 0.0
    %242 = vmatprep.subr.mxu0 0.0
    %243 = vmatpush1.msra.mxu0 0.0
    %244 = vmatprep.subr.mxu0 0.0
    %245 = vmatpush1.msra.mxu0 0.0
    %246 = vmatprep.subr.mxu0 0.0
    %247 = vmatpush1.msra.mxu0 0.0
    %248 = vmatprep.subr.mxu0 0.0
    %249 = vmatpush1.msra.mxu0 0.0
    %250 = vmatprep.subr.mxu0 0.0
    %251 = vmatpush1.msra.mxu0 0.0
    %252 = vmatprep.subr.mxu0 0.0
    %253 = vmatpush1.msra.mxu0 0.0
    %254 = vmatprep.subr.mxu0 0.0
    %255 = vmatpush1.msra.mxu0 0.0
    %256 = vmatprep.subr.mxu0 0.0
    %257 = vmatpush1.msra.mxu0 0.0
    %258 = vmatprep.subr.mxu0 0.0
    %259 = vmatpush1.msra.mxu0 0.0
    %260 = vmatprep.subr.mxu0 0.0
    %261 = vmatpush1.msra.mxu0 0.0
    %262 = vmatprep.subr.mxu0 0.0
    %263 = vmatpush1.msra.mxu0 0.0
    %264 = vmatprep.mubr.f32.mxu0 0.0
    %265 = vmatmul.mubr.f32.gmra.mrb[0].mxu0 %v175
    %v266 = vpop.f32.mrb[0].mxu0
    %v267 = vadd.f32 %v198, %v266
    %v268 = vpop.f32.mrb[0].mxu0
    %269 = vmatprep.mubr.f32.mxu0 0.0
    %270 = vmatmul.mubr.f32.gmra.mrb[0].mxu0 %v176
    %v271 = vpop.f32.mrb[0].mxu0
    %v272 = vadd.f32 %v198, %v271
    %v273 = vpop.f32.mrb[0].mxu0
    %274 = vdwg.mxu0
    %v275 = vld [vmem:[%s7] sm:$0x1]
    %v276 = vld [vmem:[%s8] sm:$0x1]
    %vm277 = vcmask 523264
    %v278 = vsel %vm277, %v267, 0.0
    %279 = vadd.xlane.f32.xlu0 %v278
    %v280 = vpop.xlane.xlu0 %279
    %v281 = vsel %vm277, %v272, 0.0
    %282 = vadd.xlane.f32.xlu0 %v281
    %v283 = vpop.xlane.xlu0 %282
    %v284 = vrcp.pop 64.0
    %v285 = vmul.f32 %v280, %v284
    %v286 = vmul.f32 %v283, %v284
    %v287 = vsub.f32 %v267, %v285
    %v288 = vsub.f32 %v272, %v286
    %v289 = vmul.f32 %v287, %v287
    %v290 = vmul.f32 %v288, %v288
    %v291 = vsel %vm277, %v289, 0.0
    %292 = vadd.xlane.f32.xlu0 %v291
    %v293 = vpop.xlane.xlu0 %292
    %v294 = vsel %vm277, %v290, 0.0
    %295 = vadd.xlane.f32.xlu0 %v294
    %v296 = vpop.xlane.xlu0 %295
    %v297 = vmul.f32 %v293, %v284
    %v298 = vmul.f32 %v296, %v284
    %v299 = vadd.f32 %v297, 1e-05
    %v300 = vadd.f32 %v298, 1e-05
    %v301 = vrsqrt.pop %v299
    %v302 = vrsqrt.pop %v300
    %v304 = vlaneseq
    %v305 = vshrl.u32 %v304, 7
    %v306 = vsub.s32 0, %v305
    %v307 = vrot.slane %v275, %v306
    %v309 = vmul.f32 %v301, %v307
    %v310 = vmul.f32 %v302, %v307
    %v311 = vmul.f32 %v287, %v309
    %v312 = vmul.f32 %v288, %v310
    %v314 = vlaneseq
    %v315 = vshrl.u32 %v314, 7
    %v316 = vsub.s32 0, %v315
    %v317 = vrot.slane %v276, %v316
    %v319 = vadd.f32 %v311, %v317
    %v320 = vadd.f32 %v312, %v317
    %v321 = vmax.f32 %v319, 0.0
    %v322 = vmax.f32 %v320, 0.0
    %v323 = vld [vmem:[%s9] sm:$0xff]
    %v324 = vld [vmem:[%s9 + $0x8] sm:$0xff]
    %v325 = vld [vmem:[%s9 + $0x10] sm:$0xff]
    %v326 = vld [vmem:[%s9 + $0x18] sm:$0xff]
    %v327 = vld [vmem:[%s9 + $0x20] sm:$0xff]
    %v328 = vld [vmem:[%s9 + $0x28] sm:$0xff]
    %v329 = vld [vmem:[%s9 + $0x30] sm:$0xff]
    %v330 = vld [vmem:[%s9 + $0x38] sm:$0xff]
    %v331 = vld [vmem:[%s10] sm:$0x1]
    %v333 = vlaneseq
    %v334 = vshrl.u32 %v333, 7
    %v335 = vsub.s32 0, %v334
    %v336 = vrot.slane %v331, %v335
    %v339 = vsel %vm277, %v321, 0
    %v342 = vsel %vm277, %v322, 0
    %344 = vmatprep.subr.mxu0 0.0
    %345 = vmatpush1.msra.mxu0 %v323
    %346 = vmatprep.subr.mxu0 0.0
    %347 = vmatpush1.msra.mxu0 %v324
    %348 = vmatprep.subr.mxu0 0.0
    %349 = vmatpush1.msra.mxu0 %v325
    %350 = vmatprep.subr.mxu0 0.0
    %351 = vmatpush1.msra.mxu0 %v326
    %352 = vmatprep.subr.mxu0 0.0
    %353 = vmatpush1.msra.mxu0 %v327
    %354 = vmatprep.subr.mxu0 0.0
    %355 = vmatpush1.msra.mxu0 %v328
    %356 = vmatprep.subr.mxu0 0.0
    %357 = vmatpush1.msra.mxu0 %v329
    %358 = vmatprep.subr.mxu0 0.0
    %359 = vmatpush1.msra.mxu0 %v330
    %360 = vmatprep.subr.mxu0 0.0
    %361 = vmatpush1.msra.mxu0 0.0
    %362 = vmatprep.subr.mxu0 0.0
    %363 = vmatpush1.msra.mxu0 0.0
    %364 = vmatprep.subr.mxu0 0.0
    %365 = vmatpush1.msra.mxu0 0.0
    %366 = vmatprep.subr.mxu0 0.0
    %367 = vmatpush1.msra.mxu0 0.0
    %368 = vmatprep.subr.mxu0 0.0
    %369 = vmatpush1.msra.mxu0 0.0
    %370 = vmatprep.subr.mxu0 0.0
    %371 = vmatpush1.msra.mxu0 0.0
    %372 = vmatprep.subr.mxu0 0.0
    %373 = vmatpush1.msra.mxu0 0.0
    %374 = vmatprep.subr.mxu0 0.0
    %375 = vmatpush1.msra.mxu0 0.0
    %376 = vmatprep.subr.mxu0 0.0
    %377 = vmatpush1.msra.mxu0 0.0
    %378 = vmatprep.subr.mxu0 0.0
    %379 = vmatpush1.msra.mxu0 0.0
    %380 = vmatprep.subr.mxu0 0.0
    %381 = vmatpush1.msra.mxu0 0.0
    %382 = vmatprep.subr.mxu0 0.0
    %383 = vmatpush1.msra.mxu0 0.0
    %384 = vmatprep.subr.mxu0 0.0
    %385 = vmatpush1.msra.mxu0 0.0
    %386 = vmatprep.subr.mxu0 0.0
    %387 = vmatpush1.msra.mxu0 0.0
    %388 = vmatprep.subr.mxu0 0.0
    %389 = vmatpush1.msra.mxu0 0.0
    %390 = vmatprep.subr.mxu0 0.0
    %391 = vmatpush1.msra.mxu0 0.0
    %392 = vmatprep.subr.mxu0 0.0
    %393 = vmatpush1.msra.mxu0 0.0
    %394 = vmatprep.subr.mxu0 0.0
    %395 = vmatpush1.msra.mxu0 0.0
    %396 = vmatprep.subr.mxu0 0.0
    %397 = vmatpush1.msra.mxu0 0.0
    %398 = vmatprep.subr.mxu0 0.0
    %399 = vmatpush1.msra.mxu0 0.0
    %400 = vmatprep.subr.mxu0 0.0
    %401 = vmatpush1.msra.mxu0 0.0
    %402 = vmatprep.subr.mxu0 0.0
    %403 = vmatpush1.msra.mxu0 0.0
    %404 = vmatprep.subr.mxu0 0.0
    %405 = vmatpush1.msra.mxu0 0.0
    %406 = vmatprep.subr.mxu0 0.0
    %407 = vmatpush1.msra.mxu0 0.0
    %408 = vmatprep.mubr.f32.mxu0 0.0
    %409 = vmatmul.mubr.f32.gmra.mrb[0].mxu0 %v339
    %v410 = vpop.f32.mrb[0].mxu0
    %v411 = vadd.f32 %v336, %v410
    %v412 = vpop.f32.mrb[0].mxu0
    %413 = vmatprep.mubr.f32.mxu0 0.0
    %414 = vmatmul.mubr.f32.gmra.mrb[0].mxu0 %v342
    %v415 = vpop.f32.mrb[0].mxu0
    %v416 = vadd.f32 %v336, %v415
    %v417 = vpop.f32.mrb[0].mxu0
    %418 = vdwg.mxu0
    %419 = vst [vmem:[#allocation2] sm:$0xff] %v411
    %420 = vst [vmem:[#allocation2 + $0x8] sm:$0xff] %v416
    // Predicated region
    $region46: #{mlp_small_forward.1} parent=1 // pred_check
      _
    $region47: #{mlp_small_forward.1} parent=1 // pred_check_branch
      %422 = sbr.rel (0) target = $region49
    $region48: #{mlp_small_forward.1} parent=1 // pred_region
      %s424 = ssub.s32 256, 256
      %425 = vsyncadd [#allocation3], %s424
      %s426 = sshll.u32 [#allocation2], 4
      %s427 = int_to_ptr.vmem [resolvable:$true] %s426
      %432 = dma.vmem_to_hbm [thread:$0]  %s427, 256, %s11, [#allocation3], 128, 128, 8
    $region49: #{mlp_small_forward.1} parent=1 // pred_fallthru
      _
    // Predicated region
    $region50: #{mlp_small_forward.1} parent=1 // pred_check
      _
    $region51: #{mlp_small_forward.1} parent=1 // pred_check_branch
      %434 = sbr.rel (0) target = $region53
    $region52: #{mlp_small_forward.1} parent=1 // pred_region
      %435 = dma.done [#allocation3], 256
    $region53: #{mlp_small_forward.1} parent=1 // pred_fallthru
      _
    %436 = vsyncpa [#allocation3], 1

</llo_original>
